<compile_context>
chip_gen: v7x
topology: tpu7x:2x2x1
jax: 0.10.0
libtpu: 0.0.40
codegen_flags: <defaults>
</compile_context>

<pallas_src>
import functools

import jax
import jax.numpy as jnp
from jax.experimental import pallas as pl
from jax.experimental.pallas import tpu as pltpu


# ----------------------------------------------------------------------------
# Softmax / log-softmax kernels over the last (vocab) axis.
# Each grid step sees a (1, tT, V) block; rows are independent, so padded
# remainder rows of the last T-block are harmless.
# ----------------------------------------------------------------------------
def _log_softmax_kernel(x_ref, o_ref):
    x = x_ref[...].astype(jnp.float32)
    m = jnp.max(x, axis=-1, keepdims=True)
    shifted = x - m
    lse = jnp.log(jnp.sum(jnp.exp(shifted), axis=-1, keepdims=True))
    o_ref[...] = (shifted - lse).astype(o_ref.dtype)


def _softmax_kernel(x_ref, o_ref):
    x = x_ref[...].astype(jnp.float32)
    m = jnp.max(x, axis=-1, keepdims=True)
    e = jnp.exp(x - m)
    denom = jnp.sum(e, axis=-1, keepdims=True)
    # approx reciprocal -> EUP vrcp slot (otherwise idle); error ~1e-3 rel,
    # well within softmax tolerance.
    o_ref[...] = (e * pl.reciprocal(denom, approx=True)).astype(o_ref.dtype)


def _pick_t_tile(T, V, target_elems=512 * 1024):
    """Choose a T-tile: ~512K elements per block, multiple of 8, <= T."""
    tT = (target_elems // max(V, 1)) // 8 * 8
    tT = max(8, tT)
    if tT >= T:
        return T  # full-extent block is always layout-legal
    return tT


@functools.partial(jax.jit, static_argnames=("log_probs",))
def fake_decoder_get_normalized_probs(net_out, log_probs=True):
    """Pallas (log-)softmax over the vocab (last) axis of (B, T, V) logits.

    Output dtype follows the input dtype (promotion to f32 happens only
    inside the kernel), which halves HBM write traffic for bf16 logits.
    """
    B, T, V = net_out.shape
    orig_v = V

    # Keep the vocab axis lane-dense: pad to a multiple of 128 with a very
    # negative value so padded lanes vanish under max/exp/sum.
    pad_v = (-V) % 128
    x = net_out
    if pad_v:
        x = jnp.pad(x, ((0, 0), (0, 0), (0, pad_v)),
                    constant_values=jnp.asarray(-1e30, net_out.dtype))
        V = V + pad_v

    tT = _pick_t_tile(T, V)
    grid = (B, pl.cdiv(T, tT))
    kernel = _log_softmax_kernel if log_probs else _softmax_kernel

    out = pl.pallas_call(
        kernel,
        out_shape=jax.ShapeDtypeStruct((B, T, V), net_out.dtype),
        grid_spec=pltpu.PrefetchScalarGridSpec(
            num_scalar_prefetch=0,
            grid=grid,
            in_specs=[pl.BlockSpec((1, tT, V), lambda b, t: (b, t, 0))],
            out_specs=pl.BlockSpec((1, tT, V), lambda b, t: (b, t, 0)),
        ),
        compiler_params=pltpu.CompilerParams(
            # Both axes are fully independent (row-wise softmax) -> shard
            # across TensorCores where available (v7x has 2 TCs/chip).
            dimension_semantics=("parallel", "parallel"),
            # Unlock v5e's low 16 MiB default scoped-VMEM while staying well
            # under v7x's 64 MiB physical VMEM (per-step footprint ~8-16 MiB
            # with double buffering at the chosen tile size).
            vmem_limit_bytes=32 * 1024 * 1024,
        ),
    )(x)

    if pad_v:
        out = out[..., :orig_v]
    return out


# ----------------------------------------------------------------------------
# Thin Python wrapper mirroring the module's interface.
# ----------------------------------------------------------------------------
class FakeDecoderModelPallas:
    def __init__(self, net_out, target):
        self.net_out = net_out
        self.target = target

    def forward(self, **unused):
        # FakeDecoderModel.forward is a pure pass-through of the stored
        # tensor: no kernel, no copy, no HBM traffic.
        return self.net_out

    def get_normalized_probs(self, net_output, log_probs, sample=None):
        return fake_decoder_get_normalized_probs(net_output, log_probs=log_probs)

    def get_targets(self, *unused):
        return self.target

    # TODO(synk): `decoder` property only forwards the wrapped model's decoder
    # object; there is no tensor compute to express as a kernel.


if __name__ == "__main__":
    key = jax.random.PRNGKey(0)
    k1, k2, k3 = jax.random.split(key, 3)

    # Small shapes consistent with the module: (B, T, V) logits, V lane-dense.
    B, T, V = 2, 8, 128
    net_out = jax.random.normal(k1, (B, T, V), dtype=jnp.float32)
    target = jax.random.randint(k2, (B, T), 0, V, dtype=jnp.int32)

    model = FakeDecoderModelPallas(net_out, target)

    # forward(): pure pass-through of net_out.
    out = model.forward()
    out = jax.block_until_ready(out)
    assert out.shape == net_out.shape and out.dtype == net_out.dtype
    assert bool(jnp.all(out == net_out))

    # get_normalized_probs(log_probs=True): log-softmax over vocab.
    logp = jax.block_until_ready(model.get_normalized_probs(net_out, True))
    ref_logp = jax.nn.log_softmax(net_out.astype(jnp.float32), axis=-1)
    assert logp.shape == net_out.shape
    assert bool(jnp.allclose(logp, ref_logp, atol=1e-5, rtol=1e-5))

    # get_normalized_probs(log_probs=False): softmax (approx reciprocal).
    prob = jax.block_until_ready(model.get_normalized_probs(net_out, False))
    ref_prob = jax.nn.softmax(net_out.astype(jnp.float32), axis=-1)
    assert bool(jnp.allclose(prob, ref_prob, atol=2e-3, rtol=2e-3))

    # Non-lane-multiple vocab path (padding + slice-back).
    V2 = 100
    net_out2 = jax.random.normal(k3, (B, T, V2), dtype=jnp.float32)
    logp2 = jax.block_until_ready(
        fake_decoder_get_normalized_probs(net_out2, log_probs=True))
    ref2 = jax.nn.log_softmax(net_out2.astype(jnp.float32), axis=-1)
    assert logp2.shape == (B, T, V2)
    assert bool(jnp.allclose(logp2, ref2, atol=1e-5, rtol=1e-5))

    # get_targets(): stored target passthrough.
    tgt = model.get_targets()
    assert bool(jnp.all(tgt == target))

    print("KERNEL_OK")
</pallas_src>

<mosaic_0001>
module attributes {stable_mosaic.version = 11 : i64} {
  func.func @_log_softmax_kernel(%arg0: i32, %arg1: i32, %arg2: memref<1x8x128xf32, #tpu.memory_space<vmem>>, %arg3: memref<1x8x128xf32, #tpu.memory_space<vmem>>) attributes {dimension_semantics = [#tpu.dimension_semantics<parallel>, #tpu.dimension_semantics<parallel>], iteration_bounds = array<i64: 2, 1>, scalar_prefetch = 0 : i64, scratch_operands = 0 : i64, tpu.core_type = #tpu.core_type<tc>, window_params = [{transform_indices = @transform_0, window_bounds = array<i64: 1, 8, 128>}, {transform_indices = @transform_1, window_bounds = array<i64: 1, 8, 128>}]} {
    %c0 = arith.constant 0 : index
    %c0_0 = arith.constant 0 : index
    %c0_1 = arith.constant 0 : index
    %0 = vector.load %arg2[%c0, %c0_0, %c0_1] : memref<1x8x128xf32, #tpu.memory_space<vmem>>, vector<1x8x128xf32>
    %cst = arith.constant dense<0xFF800000> : vector<1x8xf32>
    %1 = vector.multi_reduction <maximumf>, %0, %cst [2] : vector<1x8x128xf32> to vector<1x8xf32>
    %2 = vector.shape_cast %1 : vector<1x8xf32> to vector<1x8x1xf32>
    %3 = vector.broadcast %2 : vector<1x8x1xf32> to vector<1x8x128xf32>
    %4 = arith.subf %0, %3 : vector<1x8x128xf32>
    %5 = math.exp %4 : vector<1x8x128xf32>
    %cst_2 = arith.constant dense<0.000000e+00> : vector<1x8xf32>
    %6 = vector.multi_reduction <add>, %5, %cst_2 [2] : vector<1x8x128xf32> to vector<1x8xf32>
    %7 = vector.shape_cast %6 : vector<1x8xf32> to vector<1x8x1xf32>
    %8 = math.log %7 : vector<1x8x1xf32>
    %9 = vector.broadcast %8 : vector<1x8x1xf32> to vector<1x8x128xf32>
    %10 = arith.subf %4, %9 : vector<1x8x128xf32>
    %c0_3 = arith.constant 0 : index
    %c0_4 = arith.constant 0 : index
    %c0_5 = arith.constant 0 : index
    %11 = vector.load %arg3[%c0_3, %c0_4, %c0_5] : memref<1x8x128xf32, #tpu.memory_space<vmem>>, vector<1x8x128xf32>
    tpu.vector_store %arg3[%c0_3, %c0_4, %c0_5], %10 {strides = array<i32>} : memref<1x8x128xf32, #tpu.memory_space<vmem>>, vector<1x8x128xf32>,
    return
  }
  func.func @transform_0(%arg0: i32, %arg1: i32) -> (i32, i32, i32) {
    %c0_i32 = arith.constant 0 : i32
    %c0_i32_0 = arith.constant 0 : i32
    return %arg0, %arg1, %c0_i32 : i32, i32, i32
  }
  func.func @transform_1(%arg0: i32, %arg1: i32) -> (i32, i32, i32) {
    %c0_i32 = arith.constant 0 : i32
    %c0_i32_0 = arith.constant 0 : i32
    return %arg0, %arg1, %c0_i32 : i32, i32, i32
  }
}

</mosaic_0001>

<llo_original>
// kernel: fake_decoder_get_normalized_probs.1
$region0: #{fake_decoder_get_normalized_probs.1}
  #allocation0 [shape = 'u32[]', space=smem, size = 0x4, offset = 0x4, fixed_abs, tag = 'smem constant byte address 0x4 - core index']
  #allocation1 [shape = 'u32[144,128]{1,0:T(1,128)}', space=vmem, size = 0x12000, scoped, tag = 'internal scratch']
  %s0 = inlined_call_operand.hbm [shape: f32[2,8,128], index: 0, kind: input, shape index: {}]
  %s1 = inlined_call_operand.hbm [shape: f32[2,8,128], index: 1, kind: output, shape index: {}]
  %s2 = sld [smem:[#allocation0]]
  $region41: #{fake_decoder_get_normalized_probs.1} parent=0
    _
  %s4 = ssub.s32 1, %s2
  %s5 = scalar_select 0, %s4, %s2
  $region1: #{fake_decoder_get_normalized_probs.1} parent=0
    #allocation2 [shape = 'u8[8192]{0}', space=vmem, size = 0x2000, scoped, tag = 'input window, operand 0']
    #allocation3 [shape = 's32[2]{0}', space=sflag, size = 0x8, scoped, tag = 'scoped memory for fake_decoder_get_normalized_probs.1']
    #allocation4 [shape = 's32[2]{0}', space=sflag, size = 0x8, scoped, tag = 'scoped memory for fake_decoder_get_normalized_probs.1']
    #allocation5 [shape = 'u8[8192]{0}', space=vmem, size = 0x2000, scoped, tag = 'output window, operand 0']
    %6 = vsyncpa [#allocation3], 0
    %s7 = scalar_lea.sflag [#allocation3], 1
    %8 = vsyncpa %s7, 0
    %9 = vsyncpa [#allocation4], 0
    %s10 = scalar_lea.sflag [#allocation4], 1
    %11 = vsyncpa %s10, 0
    loop: start=0, step=1, limit=4
    $region2: #{fake_decoder_get_normalized_probs.1} parent=1 // loop_pre_header
      _
    $region3: #{fake_decoder_get_normalized_probs.1} parent=1 // loop_header
      %s13 = sphi 0, %s17
      %p14 = scmp.ge.s32.totalorder %s13, 4
      %s20 = sphi 0, %s32
      %s21 = sphi 0, %s28
      %s22 = sphi 0, %s20
      %s23 = sphi 0, %s21
      %s24 = sphi 0, %s22
      %s25 = sphi 0, %s23
      %s37 = sphi 0, %s39
      %s40 = sphi 0, %s37
      %s41 = sphi 0, %s40
      %s57 = sphi 0, %s41
      %s65 = sphi 0, %s67
      %s68 = sphi 0, %s65
      %s69 = sphi 0, %s68
      %s85 = sphi 0, %s69
    $region4: #{fake_decoder_get_normalized_probs.1} parent=1 // loop_header_branch
      %16 = sbr.rel (%p14) target = $region8
    $region5: #{fake_decoder_get_normalized_probs.1} parent=1 // loop_body
      %s18 = ssub.s32 %s13, 1
      %s19 = ssub.s32 %s13, 2
      %s26 = sadd.s32 1, %s21
      %p27 = scmp.ge.s32.totalorder %s26, 1
      %s28 = scalar_select %p27, 0, %s26
      %s29 = sadd.s32 1, %s20
      %s30 = scalar_select %p27, %s29, %s20
      %p31 = scmp.ge.s32.totalorder %s30, 2
      %s32 = scalar_select %p31, 0, %s30
      %s33 = ssub.s32 %s20, %s32
      %s34 = ssub.s32 %s21, %s28
      %s35 = sor.u32 %s33, %s34
      %p36 = scmp.eq.s32.totalorder %s35, 0
      %s38 = sadd.s32 %s37, 1
      %s39 = scalar_select %p36, %s37, %s38
      %p42 = pneg %p36
      %p43 = scmp.eq.s32.totalorder %s13, 1
      %p44 = por %p42, %p43
      %p45 = scmp.ne.s32.totalorder %s37, %s40
      %p46 = scmp.eq.s32.totalorder %s13, 0
      %p47 = por %p45, %p46
      %p48 = scmp.ne.s32.totalorder %s37, %s40
      %p49 = scmp.eq.s32.totalorder %s18, 1
      %p50 = por %p48, %p49
      %p51 = scmp.ne.s32.totalorder %s40, %s41
      %p52 = scmp.eq.s32.totalorder %s18, 0
      %p53 = por %p51, %p52
      %p54 = scmp.ne.s32.totalorder %s40, %s41
      %p55 = scmp.eq.s32.totalorder %s19, 1
      %p56 = por %p54, %p55
      %p58 = scmp.ne.s32.totalorder %s41, %s57
      %p59 = scmp.eq.s32.totalorder %s19, 0
      %p60 = por %p58, %p59
      %s61 = ssub.s32 %s20, %s32
      %s62 = ssub.s32 %s21, %s28
      %s63 = sor.u32 %s61, %s62
      %p64 = scmp.eq.s32.totalorder %s63, 0
      %s66 = sadd.s32 %s65, 1
      %s67 = scalar_select %p64, %s65, %s66
      %p70 = pneg %p64
      %p71 = scmp.eq.s32.totalorder %s13, 1
      %p72 = por %p70, %p71
      %p73 = scmp.ne.s32.totalorder %s65, %s68
      %p74 = scmp.eq.s32.totalorder %s13, 0
      %p75 = por %p73, %p74
      %p76 = scmp.ne.s32.totalorder %s65, %s68
      %p77 = scmp.eq.s32.totalorder %s18, 1
      %p78 = por %p76, %p77
      %p79 = scmp.ne.s32.totalorder %s68, %s69
      %p80 = scmp.eq.s32.totalorder %s18, 0
      %p81 = por %p79, %p80
      %p82 = scmp.ne.s32.totalorder %s68, %s69
      %p83 = scmp.eq.s32.totalorder %s19, 1
      %p84 = por %p82, %p83
      %p86 = scmp.ne.s32.totalorder %s69, %s85
      %p87 = scmp.eq.s32.totalorder %s19, 0
      %p88 = por %p86, %p87
      %p89 = scmp.le.s32.totalorder 1, %s13
      %p90 = scmp.lt.s32.totalorder %s13, 3
      %p91 = pnand %p89, %p90
      %p92 = pneg %p91
      // Predicated region
      $region9: #{fake_decoder_get_normalized_probs.1} parent=5 // pred_check
        _
      $region10: #{fake_decoder_get_normalized_probs.1} parent=5 // pred_check_branch
        %94 = sbr.rel (%p91) target = $region12
      $region11: #{fake_decoder_get_normalized_probs.1} parent=5 // pred_region
        %s95 = ssub.s32 %s13, 1
      $region12: #{fake_decoder_get_normalized_probs.1} parent=5 // pred_fallthru
        _
      %p96 = scmp.lt.s32.totalorder %s13, 2
      // Predicated region
      $region13: #{fake_decoder_get_normalized_probs.1} parent=5 // pred_check
        %p97 = pneg %p96
      $region14: #{fake_decoder_get_normalized_probs.1} parent=5 // pred_check_branch
        %99 = sbr.rel (%p97) target = $region16
      $region15: #{fake_decoder_get_normalized_probs.1} parent=5 // pred_region
        // Predicated region
        $region17: #{fake_decoder_get_normalized_probs.1} parent=15 // pred_check
          %p100 = pneg %p47
        $region18: #{fake_decoder_get_normalized_probs.1} parent=15 // pred_check_branch
          %102 = sbr.rel (%p100) target = $region20
        $region19: #{fake_decoder_get_normalized_probs.1} parent=15 // pred_region
          %s103 = sand.u32 %s37, 1
          %s104 = scalar_lea.sflag [#allocation3], %s103
          %s105 = sand.u32 %s37, 1
          %s106 = smul.addr %s105, 8
          %s107 = scalar_lea.vmem [#allocation2], %s106
          %s109 = ssub.s32 128, 128
          %110 = vsyncadd %s104, %s109
          %s111 = sadd.s32 %s21, %s20
          %s112 = smul.addr %s111, 128
          %s113 = scalar_lea.hbm %s0, %s112
          %s115 = sshll.u32 %s107, 4
          %s116 = int_to_ptr.vmem [resolvable:$true] %s115
          %118 = dma.hbm_to_vmem [thread:$0]  %s113, 128, %s116, %s104
        $region20: #{fake_decoder_get_normalized_probs.1} parent=15 // pred_fallthru
          _
      $region16: #{fake_decoder_get_normalized_probs.1} parent=5 // pred_fallthru
        _
      %p119 = scmp.le.s32.totalorder 1, %s13
      %p120 = scmp.lt.s32.totalorder %s13, 3
      %p121 = pnand %p119, %p120
      %p122 = pneg %p121
      // Predicated region
      $region21: #{fake_decoder_get_normalized_probs.1} parent=5 // pred_check
        _
      $region22: #{fake_decoder_get_normalized_probs.1} parent=5 // pred_check_branch
        %124 = sbr.rel (%p121) target = $region24
      $region23: #{fake_decoder_get_normalized_probs.1} parent=5 // pred_region
        %s125 = ssub.s32 %s13, 1
        %s126 = sand.u32 %s40, 1
        %s127 = scalar_lea.sflag [#allocation3], %s126
        %s128 = sand.u32 %s40, 1
        %s129 = smul.addr %s128, 8
        %s130 = scalar_lea.vmem [#allocation2], %s129
        // Predicated region
        $region25: #{fake_decoder_get_normalized_probs.1} parent=23 // pred_check
          %p131 = pneg %p53
        $region26: #{fake_decoder_get_normalized_probs.1} parent=23 // pred_check_branch
          %133 = sbr.rel (%p131) target = $region28
        $region27: #{fake_decoder_get_normalized_probs.1} parent=23 // pred_region
          %134 = dma.done %s127, 128
        $region28: #{fake_decoder_get_normalized_probs.1} parent=23 // pred_fallthru
          _
        %s135 = sand.u32 %s40, 1
        %s136 = scalar_lea.sflag [#allocation3], %s135
        %s137 = sand.u32 %s40, 1
        %s138 = smul.addr %s137, 8
        %s139 = scalar_lea.vmem [#allocation2], %s138
        %p140 = pneg %p53
        %p141 = pneg %p50
        %p142 = pneg %p81
        %p143 = pneg %p78
        %s144 = sand.u32 %s68, 1
        %s145 = scalar_lea.sflag [#allocation4], %s144
        %s146 = sand.u32 %s68, 1
        %s147 = smul.addr %s146, 8
        %s148 = scalar_lea.vmem [#allocation5], %s147
        %v149 = vld [vmem:[%s130] sm:$0xff]
        %150 = vmax.xlane.f32.xlu0 %v149
        %v151 = vpop.xlane.xlu0 %150
        %v152 = vsub.f32 %v149, %v151
        %v153 = vmul.f32 %v152, 1.442695
        %v154 = vpow.pop %v153
        %155 = vadd.xlane.f32.xlu0 %v154
        %v156 = vpop.xlane.xlu0 %155
        %v157 = vlog2.pop %v156
        %v158 = vmul.f32 %v157, 0.6931472
        %v159 = vsub.f32 %v152, %v158
        %160 = vst [vmem:[%s148] sm:$0xff] %v159
        %s161 = sand.u32 %s68, 1
        %s162 = scalar_lea.sflag [#allocation4], %s161
        %s163 = sand.u32 %s68, 1
        %s164 = smul.addr %s163, 8
        %s165 = scalar_lea.vmem [#allocation5], %s164
        // Predicated region
        $region29: #{fake_decoder_get_normalized_probs.1} parent=23 // pred_check
          %p166 = pneg %p78
        $region30: #{fake_decoder_get_normalized_probs.1} parent=23 // pred_check_branch
          %168 = sbr.rel (%p166) target = $region32
        $region31: #{fake_decoder_get_normalized_probs.1} parent=23 // pred_region
          %s170 = ssub.s32 128, 128
          %171 = vsyncadd %s162, %s170
          %s172 = sadd.s32 %s23, %s22
          %s173 = smul.addr %s172, 128
          %s174 = scalar_lea.hbm %s1, %s173
          %s176 = sshll.u32 %s165, 4
          %s177 = int_to_ptr.vmem [resolvable:$true] %s176
          %179 = dma.vmem_to_hbm [thread:$0]  %s177, 128, %s174, %s162
        $region32: #{fake_decoder_get_normalized_probs.1} parent=23 // pred_fallthru
          _
      $region24: #{fake_decoder_get_normalized_probs.1} parent=5 // pred_fallthru
        _
      %p180 = scmp.le.s32.totalorder 2, %s13
      // Predicated region
      $region33: #{fake_decoder_get_normalized_probs.1} parent=5 // pred_check
        %p181 = pneg %p180
      $region34: #{fake_decoder_get_normalized_probs.1} parent=5 // pred_check_branch
        %183 = sbr.rel (%p181) target = $region36
      $region35: #{fake_decoder_get_normalized_probs.1} parent=5 // pred_region
        %s184 = ssub.s32 %s13, 2
        // Predicated region
        $region37: #{fake_decoder_get_normalized_probs.1} parent=35 // pred_check
          %p185 = pneg %p84
        $region38: #{fake_decoder_get_normalized_probs.1} parent=35 // pred_check_branch
          %187 = sbr.rel (%p185) target = $region40
        $region39: #{fake_decoder_get_normalized_probs.1} parent=35 // pred_region
          %s188 = sand.u32 %s69, 1
          %s189 = scalar_lea.sflag [#allocation4], %s188
          %s190 = sand.u32 %s69, 1
          %s191 = smul.addr %s190, 8
          %s192 = scalar_lea.vmem [#allocation5], %s191
          %193 = dma.done %s189, 128
        $region40: #{fake_decoder_get_normalized_probs.1} parent=35 // pred_fallthru
          _
      $region36: #{fake_decoder_get_normalized_probs.1} parent=5 // pred_fallthru
        _
    $region6: #{fake_decoder_get_normalized_probs.1} parent=1 // loop_footer
      %s17 = sadd.s32 1, %s13
    $region7: #{fake_decoder_get_normalized_probs.1} parent=1 // loop_footer_branch
      %12 = sbr.rel target = $region3
    $region8: #{fake_decoder_get_normalized_probs.1} parent=1 // loop_exit
      _
    %194 = vsyncpa [#allocation3], 1
    %s195 = scalar_lea.sflag [#allocation3], 1
    %196 = vsyncpa %s195, 1
    %197 = vsyncpa [#allocation4], 1
    %s198 = scalar_lea.sflag [#allocation4], 1
    %199 = vsyncpa %s198, 1

</llo_original>
